<compile_context>
chip_gen: v5e
topology: v5e:2x2
jax: 0.10.0
libtpu: 0.0.40
codegen_flags: <defaults>
</compile_context>

<pallas_src>
import functools

import jax
import jax.numpy as jnp
from jax.experimental import pallas as pl
from jax.experimental.pallas import tpu as pltpu


# ----------------------------------------------------------------------------
# Kernels
# ----------------------------------------------------------------------------
def _rmsnorm_rep_kernel(x_ref, g_ref, o_ref, *, scale, eps):
    x = x_ref[...]
    # Reduction in f32 for accuracy; keep only a (tm, 1) f32 factor live.
    ss = jnp.sum(jnp.square(x.astype(jnp.float32)), axis=-1, keepdims=True)
    # 1 / max(||x||_2, eps) == rsqrt(max(sum(x^2), eps^2))   (EUP rsqrt, no divide)
    inv = jax.lax.rsqrt(jnp.maximum(ss, eps * eps)) * scale
    o_ref[...] = (x.astype(jnp.float32) * inv * g_ref[...]).astype(o_ref.dtype)


def _rmsnorm_rep_kernel_nogamma(x_ref, o_ref, *, scale, eps):
    x = x_ref[...]
    ss = jnp.sum(jnp.square(x.astype(jnp.float32)), axis=-1, keepdims=True)
    inv = jax.lax.rsqrt(jnp.maximum(ss, eps * eps)) * scale
    o_ref[...] = (x.astype(jnp.float32) * inv).astype(o_ref.dtype)


# ----------------------------------------------------------------------------
# Tile-size selection helpers
# ----------------------------------------------------------------------------
def _row_multiple(dtype):
    """Packed-sublane row multiple for the I/O dtype."""
    size = jnp.dtype(dtype).itemsize
    if size >= 4:
        return 8
    if size == 2:
        return 16
    return 32


def _vmem_budget_and_limit():
    """Per-generation (budget for double-buffered in+out, scoped VMEM limit)."""
    try:
        cap = int(pltpu.get_tpu_info().vmem_capacity_bytes)
    except Exception:  # not on TPU / API unavailable -> conservative default
        cap = 64 << 20
    budget = min(cap // 4, 24 << 20)   # target working set (in+out, x2 buffers)
    limit = min(cap // 2, 64 << 20)    # scoped VMEM cap with headroom
    return budget, limit


def _pick_tile_rows(rows, d, itemsize, budget_bytes, mult):
    # Bytes per tile row: 2 pipeline buffers * (input + output) + one f32 temp
    # row (the (tm,1) factor / transient upcast, not double-buffered).
    per_row = d * (2 * (itemsize + itemsize) + 4)
    tm = max(mult, (budget_bytes // per_row) // mult * mult)
    if rows <= 2 * mult:
        return rows  # tiny problem: single full-array block is allowed
    # Keep >= 2 grid steps: v7x has 2 TensorCores, and multiple steps buy
    # DMA/compute overlap on v5e/v6e too.
    two_step_cap = max(mult, ((rows - 1) // mult) * mult)
    return min(tm, two_step_cap)


# ----------------------------------------------------------------------------
# Wrapper
# ----------------------------------------------------------------------------
def rms_norm_rep(x, gamma=None, *, eps=1e-12):
    """RMSNorm_Rep.forward.

    x:     (..., dim)        any float dtype
    gamma: (dim,) or None    (None corresponds to scale=False -> gamma = 1)
    """
    orig_shape = x.shape
    d = orig_shape[-1]
    scale = float(d) ** 0.5

    x2 = x.reshape(-1, d)
    rows = x2.shape[0]
    itemsize = jnp.dtype(x.dtype).itemsize

    budget, vmem_limit = _vmem_budget_and_limit()
    mult = _row_multiple(x.dtype)
    tm = _pick_tile_rows(rows, d, itemsize, budget, mult)
    grid = (pl.cdiv(rows, tm),)

    # TODO(synk): for d < 128 the lane dimension is under-utilized; a (rows/k,
    # k*d) repack with a segmented per-d reduce would give lane-dense stores.

    x_spec = pl.BlockSpec((tm, d), lambda i: (i, 0))
    out_spec = pl.BlockSpec((tm, d), lambda i: (i, 0))
    cparams = pltpu.CompilerParams(
        dimension_semantics=("parallel",),
        vmem_limit_bytes=int(vmem_limit),
    )
    cost = pl.CostEstimate(
        flops=3 * rows * d,
        transcendentals=rows,
        bytes_accessed=2 * rows * d * itemsize + (0 if gamma is None else d * 4),
    )

    if gamma is None:
        out = pl.pallas_call(
            functools.partial(_rmsnorm_rep_kernel_nogamma, scale=scale, eps=eps),
            grid=grid,
            out_shape=jax.ShapeDtypeStruct((rows, d), x.dtype),
            in_specs=[x_spec],
            out_specs=out_spec,
            compiler_params=cparams,
            cost_estimate=cost,
        )(x2)
    else:
        g2 = gamma.reshape(1, d).astype(jnp.float32)
        out = pl.pallas_call(
            functools.partial(_rmsnorm_rep_kernel, scale=scale, eps=eps),
            grid=grid,
            out_shape=jax.ShapeDtypeStruct((rows, d), x.dtype),
            in_specs=[x_spec, pl.BlockSpec((1, d), lambda i: (0, 0))],
            out_specs=out_spec,
            compiler_params=cparams,
            cost_estimate=cost,
        )(x2, g2)

    return out.reshape(orig_shape)


# ----------------------------------------------------------------------------
# Pure-JAX reference (mirrors the PyTorch module exactly)
# ----------------------------------------------------------------------------
def rms_norm_rep_ref(x, gamma=None, eps=1e-12):
    xf = x.astype(jnp.float32)
    norm = jnp.sqrt(jnp.sum(jnp.square(xf), axis=-1, keepdims=True))
    denom = jnp.maximum(norm, eps)
    out = xf / denom * (x.shape[-1] ** 0.5)
    if gamma is not None:
        out = out * gamma.astype(jnp.float32)
    return out.astype(x.dtype)


# ----------------------------------------------------------------------------
if __name__ == "__main__":
    key = jax.random.PRNGKey(0)
    B, T, D = 2, 100, 64          # rows = 200 -> at least 2 pipelined grid steps

    k1, k2 = jax.random.split(key)
    x = jax.random.normal(k1, (B, T, D), jnp.float32)
    x = x.at[0, 0].set(0.0)       # exercise the eps clamp on an all-zero row
    gamma = 1.0 + 0.1 * jax.random.normal(k2, (D,), jnp.float32)

    # scale=True path (gamma parameter present)
    out = rms_norm_rep(x, gamma)
    jax.block_until_ready(out)
    ref = rms_norm_rep_ref(x, gamma)
    assert out.shape == x.shape and out.dtype == x.dtype
    assert bool(jnp.all(jnp.isfinite(out)))
    assert bool(jnp.allclose(out, ref, atol=1e-5, rtol=1e-5))

    # scale=False path (gamma is None -> gamma = 1)
    out2 = rms_norm_rep(x, None)
    jax.block_until_ready(out2)
    ref2 = rms_norm_rep_ref(x, None)
    assert bool(jnp.allclose(out2, ref2, atol=1e-5, rtol=1e-5))

    # bf16 path (packed-sublane tile multiple = 16)
    xb = x.astype(jnp.bfloat16)
    out3 = rms_norm_rep(xb, gamma)
    jax.block_until_ready(out3)
    ref3 = rms_norm_rep_ref(xb, gamma)
    assert out3.dtype == jnp.bfloat16
    assert bool(jnp.allclose(out3.astype(jnp.float32), ref3.astype(jnp.float32),
                             atol=3e-2, rtol=3e-2))

    print("KERNEL_OK")
</pallas_src>

<mosaic_0001>
module attributes {stable_mosaic.version = 11 : i64} {
  func.func @_rmsnorm_rep_kernel(%arg0: i32, %arg1: memref<192x64xf32, #tpu.memory_space<vmem>>, %arg2: memref<1x64xf32, #tpu.memory_space<vmem>>, %arg3: memref<192x64xf32, #tpu.memory_space<vmem>>) attributes {dimension_semantics = [#tpu.dimension_semantics<parallel>], iteration_bounds = array<i64: 2>, scalar_prefetch = 0 : i64, scratch_operands = 0 : i64, tpu.core_type = #tpu.core_type<tc>, window_params = [{transform_indices = @transform_0, window_bounds = array<i64: 192, 64>}, {pipeline_mode = #tpu.pipeline_mode<synchronous>, transform_indices = @transform_1, window_bounds = array<i64: 1, 64>}, {transform_indices = @transform_2, window_bounds = array<i64: 192, 64>}]} {
    %c0 = arith.constant 0 : index
    %c0_0 = arith.constant 0 : index
    %0 = vector.load %arg1[%c0, %c0_0] : memref<192x64xf32, #tpu.memory_space<vmem>>, vector<192x64xf32>
    %1 = arith.mulf %0, %0 : vector<192x64xf32>
    %cst = arith.constant dense<0.000000e+00> : vector<192xf32>
    %2 = vector.multi_reduction <add>, %1, %cst [1] : vector<192x64xf32> to vector<192xf32>
    %3 = vector.shape_cast %2 : vector<192xf32> to vector<192x1xf32>
    %cst_1 = arith.constant 1.000000e-24 : f32
    %4 = vector.broadcast %cst_1 : f32 to vector<192x1xf32>
    %5 = arith.maximumf %3, %4 : vector<192x1xf32>
    %6 = math.rsqrt %5 : vector<192x1xf32>
    %cst_2 = arith.constant 8.000000e+00 : f32
    %7 = vector.broadcast %cst_2 : f32 to vector<192x1xf32>
    %8 = arith.mulf %6, %7 : vector<192x1xf32>
    %9 = vector.broadcast %8 : vector<192x1xf32> to vector<192x64xf32>
    %10 = arith.mulf %0, %9 : vector<192x64xf32>
    %c0_3 = arith.constant 0 : index
    %c0_4 = arith.constant 0 : index
    %11 = vector.load %arg2[%c0_3, %c0_4] : memref<1x64xf32, #tpu.memory_space<vmem>>, vector<1x64xf32>
    %12 = vector.broadcast %11 : vector<1x64xf32> to vector<192x64xf32>
    %13 = arith.mulf %10, %12 : vector<192x64xf32>
    %c0_5 = arith.constant 0 : index
    %c0_6 = arith.constant 0 : index
    %14 = vector.load %arg3[%c0_5, %c0_6] : memref<192x64xf32, #tpu.memory_space<vmem>>, vector<192x64xf32>
    tpu.vector_store %arg3[%c0_5, %c0_6], %13 {strides = array<i32>} : memref<192x64xf32, #tpu.memory_space<vmem>>, vector<192x64xf32>,
    return
  }
  func.func @transform_0(%arg0: i32) -> (i32, i32) {
    %c0_i32 = arith.constant 0 : i32
    %c0_i32_0 = arith.constant 0 : i32
    return %arg0, %c0_i32 : i32, i32
  }
  func.func @transform_1(%arg0: i32) -> (i32, i32) {
    %c0_i32 = arith.constant 0 : i32
    %c0_i32_0 = arith.constant 0 : i32
    %c0_i32_1 = arith.constant 0 : i32
    return %c0_i32, %c0_i32_0 : i32, i32
  }
  func.func @transform_2(%arg0: i32) -> (i32, i32) {
    %c0_i32 = arith.constant 0 : i32
    %c0_i32_0 = arith.constant 0 : i32
    return %arg0, %c0_i32 : i32, i32
  }
}

</mosaic_0001>

<llo_original>
// kernel: tpu_custom_call.1
$region0: #{tpu_custom_call.1}
  #allocation0 [shape = 'u32[]', space=smem, size = 0x4, offset = 0x4, fixed_abs, tag = 'smem constant byte address 0x4 - core index']
  #allocation1 [shape = 'u32[72,128]{1,0:T(1,128)}', space=vmem, size = 0x9000, scoped, tag = 'internal scratch']
  %s0 = inlined_call_operand.vmem [shape: f32[200,64], index: 0, kind: input, shape index: {}]
  %s1 = inlined_call_operand.vmem [shape: f32[1,64], index: 1, kind: input, shape index: {}]
  %s2 = inlined_call_operand.vmem [shape: f32[200,64], index: 2, kind: output, shape index: {}]
  %s3 = sld [smem:[#allocation0]]
  $region89: #{tpu_custom_call.1} parent=0
    _
  %s5 = ssub.s32 1, %s3
  %s6 = scalar_select 0, %s5, %s3
  $region1: #{tpu_custom_call.1} parent=0
    #allocation2 [shape = 'u8[196608]{0}', space=vmem, size = 0x30000, scoped, tag = 'output window, operand 0']
    loop: start=0, step=1, limit=4
    $region2: #{tpu_custom_call.1} parent=1 // loop_pre_header
      _
    $region3: #{tpu_custom_call.1} parent=1 // loop_header
      %s8 = sphi 0, %s12
      %p9 = scmp.ge.s32.totalorder %s8, 4
      %s18 = sphi 0, %s20
      %s21 = sphi 0, %s18
      %s22 = sphi 0, %s21
      %s38 = sphi 0, %s22
      %s42 = sphi 0, %s42
      %s44 = sphi 0, %s42
      %s45 = sphi 0, %s44
      %s59 = sphi 0, %s45
      %s65 = sphi 0, %s67
      %s68 = sphi 0, %s65
      %s69 = sphi 0, %s68
      %s85 = sphi 0, %s69
    $region4: #{tpu_custom_call.1} parent=1 // loop_header_branch
      %11 = sbr.rel (%p9) target = $region8
    $region5: #{tpu_custom_call.1} parent=1 // loop_body
      %s13 = ssub.s32 %s8, 1
      %s14 = ssub.s32 %s8, 2
      %s15 = sadd.s32 %s8, 1
      %s16 = ssub.s32 %s8, %s15
      %p17 = scmp.eq.s32.totalorder %s16, 0
      %s19 = sadd.s32 %s18, 1
      %s20 = scalar_select %p17, %s18, %s19
      %p23 = pneg %p17
      %p24 = scmp.eq.s32.totalorder %s8, 1
      %p25 = por %p23, %p24
      %p26 = scmp.ne.s32.totalorder %s18, %s21
      %p27 = scmp.eq.s32.totalorder %s8, 0
      %p28 = por %p26, %p27
      %p29 = scmp.ne.s32.totalorder %s18, %s21
      %p30 = scmp.eq.s32.totalorder %s13, 1
      %p31 = por %p29, %p30
      %p32 = scmp.ne.s32.totalorder %s21, %s22
      %p33 = scmp.eq.s32.totalorder %s13, 0
      %p34 = por %p32, %p33
      %p35 = scmp.ne.s32.totalorder %s21, %s22
      %p36 = scmp.eq.s32.totalorder %s14, 1
      %p37 = por %p35, %p36
      %p39 = scmp.ne.s32.totalorder %s22, %s38
      %p40 = scmp.eq.s32.totalorder %s14, 0
      %p41 = por %p39, %p40
      %s43 = sadd.s32 %s42, 1
      %p46 = scmp.eq.s32.totalorder %s8, 1
      %p47 = scmp.ne.s32.totalorder %s42, %s44
      %p48 = scmp.eq.s32.totalorder %s8, 0
      %p49 = por %p47, %p48
      %p50 = scmp.ne.s32.totalorder %s42, %s44
      %p51 = scmp.eq.s32.totalorder %s13, 1
      %p52 = por %p50, %p51
      %p53 = scmp.ne.s32.totalorder %s44, %s45
      %p54 = scmp.eq.s32.totalorder %s13, 0
      %p55 = por %p53, %p54
      %p56 = scmp.ne.s32.totalorder %s44, %s45
      %p57 = scmp.eq.s32.totalorder %s14, 1
      %p58 = por %p56, %p57
      %p60 = scmp.ne.s32.totalorder %s45, %s59
      %p61 = scmp.eq.s32.totalorder %s14, 0
      %p62 = por %p60, %p61
      %s63 = ssub.s32 %s8, %s15
      %p64 = scmp.eq.s32.totalorder %s63, 0
      %s66 = sadd.s32 %s65, 1
      %s67 = scalar_select %p64, %s65, %s66
      %p70 = pneg %p64
      %p71 = scmp.eq.s32.totalorder %s8, 1
      %p72 = por %p70, %p71
      %p73 = scmp.ne.s32.totalorder %s65, %s68
      %p74 = scmp.eq.s32.totalorder %s8, 0
      %p75 = por %p73, %p74
      %p76 = scmp.ne.s32.totalorder %s65, %s68
      %p77 = scmp.eq.s32.totalorder %s13, 1
      %p78 = por %p76, %p77
      %p79 = scmp.ne.s32.totalorder %s68, %s69
      %p80 = scmp.eq.s32.totalorder %s13, 0
      %p81 = por %p79, %p80
      %p82 = scmp.ne.s32.totalorder %s68, %s69
      %p83 = scmp.eq.s32.totalorder %s14, 1
      %p84 = por %p82, %p83
      %p86 = scmp.ne.s32.totalorder %s69, %s85
      %p87 = scmp.eq.s32.totalorder %s14, 0
      %p88 = por %p86, %p87
      %p89 = scmp.le.s32.totalorder 1, %s8
      %p90 = scmp.lt.s32.totalorder %s8, 3
      %p91 = pnand %p89, %p90
      %p92 = pneg %p91
      // Predicated region
      $region9: #{tpu_custom_call.1} parent=5 // pred_check
        _
      $region10: #{tpu_custom_call.1} parent=5 // pred_check_branch
        %94 = sbr.rel (%p91) target = $region12
      $region11: #{tpu_custom_call.1} parent=5 // pred_region
        %s95 = ssub.s32 %s8, 1
        // Predicated region
        $region13: #{tpu_custom_call.1} parent=11 // pred_check
          %p96 = pneg %p55
        $region14: #{tpu_custom_call.1} parent=11 // pred_check_branch
          %98 = sbr.rel (%p96) target = $region16
        $region15: #{tpu_custom_call.1} parent=11 // pred_region
          _
        $region16: #{tpu_custom_call.1} parent=11 // pred_fallthru
          _
      $region12: #{tpu_custom_call.1} parent=5 // pred_fallthru
        _
      %p99 = scmp.lt.s32.totalorder %s8, 2
      // Predicated region
      $region17: #{tpu_custom_call.1} parent=5 // pred_check
        %p100 = pneg %p99
      $region18: #{tpu_custom_call.1} parent=5 // pred_check_branch
        %102 = sbr.rel (%p100) target = $region20
      $region19: #{tpu_custom_call.1} parent=5 // pred_region
        // Predicated region
        $region21: #{tpu_custom_call.1} parent=19 // pred_check
          %p103 = pneg %p28
        $region22: #{tpu_custom_call.1} parent=19 // pred_check_branch
          %105 = sbr.rel (%p103) target = $region24
        $region23: #{tpu_custom_call.1} parent=19 // pred_region
          %s106 = smul.u32 24, %s8
          %s107 = ssub.s32 25, %s106
          %p108 = scmp.lt.s32.totalorder %s107, 24
          %s109 = scalar_select %p108, %s107, 24
          %s110 = smul.u32 8, %s109
          %p111 = scmp.lt.s32.totalorder %s106, 24
          %s112 = scalar_select %p111, %s106, 24
          %s113 = smul.addr %s112, 8
          %s114 = scalar_lea.vmem %s0, %s113
          %s115 = smul.u32 24, %s8
          %s116 = ssub.s32 25, %s115
          %p117 = scmp.lt.s32.totalorder %s116, 24
          %s118 = scalar_select %p117, %s116, 24
          %s119 = smul.u32 8, %s118
        $region24: #{tpu_custom_call.1} parent=19 // pred_fallthru
          _
      $region20: #{tpu_custom_call.1} parent=5 // pred_fallthru
        _
      %p120 = scmp.le.s32.totalorder 1, %s8
      %p121 = scmp.lt.s32.totalorder %s8, 3
      %p122 = pnand %p120, %p121
      %p123 = pneg %p122
      // Predicated region
      $region25: #{tpu_custom_call.1} parent=5 // pred_check
        _
      $region26: #{tpu_custom_call.1} parent=5 // pred_check_branch
        %125 = sbr.rel (%p122) target = $region28
      $region27: #{tpu_custom_call.1} parent=5 // pred_region
        %s126 = ssub.s32 %s8, 1
        %s127 = smul.u32 24, %s13
        %s128 = ssub.s32 25, %s127
        %p129 = scmp.lt.s32.totalorder %s128, 24
        %s130 = scalar_select %p129, %s128, 24
        %s131 = smul.u32 8, %s130
        %p132 = scmp.lt.s32.totalorder %s127, 24
        %s133 = scalar_select %p132, %s127, 24
        %s134 = smul.addr %s133, 8
        %s135 = scalar_lea.vmem %s0, %s134
        %p136 = pneg %p34
        %p137 = pneg %p31
        %p138 = pneg %p55
        %p139 = pneg %p52
        %p140 = pneg %p81
        %p141 = pneg %p78
        %s142 = sand.u32 %s68, 1
        %s143 = sand.u32 %s68, 1
        %s144 = smul.addr %s143, 192
        %s145 = scalar_lea.vmem [#allocation2], %s144
        %s146 = smul.u32 24, %s13
        %s147 = ssub.s32 25, %s146
        %p148 = scmp.lt.s32.totalorder %s147, 24
        %s149 = scalar_select %p148, %s147, 24
        %s150 = smul.u32 8, %s149
        %p151 = scmp.lt.s32.totalorder %s146, 24
        %s152 = scalar_select %p151, %s146, 24
        %s153 = smul.addr %s152, 8
        %s154 = scalar_lea.vmem %s0, %s153
        %s155 = smul.u32 24, %s13
        %s156 = ssub.s32 25, %s155
        %p157 = scmp.lt.s32.totalorder %s156, 24
        %s158 = scalar_select %p157, %s156, 24
        %s159 = smul.u32 8, %s158
        %s160 = smul.u32 24, %s13
        %s161 = ssub.s32 25, %s160
        %p162 = scmp.lt.s32.totalorder %s161, 24
        %s163 = scalar_select %p162, %s161, 24
        %s164 = smul.u32 8, %s163
        %v165 = vld [vmem:[%s154] sm:$0xff]
        %v166 = vld [vmem:[%s154 + $0x8] sm:$0xff]
        %v167 = vld [vmem:[%s154 + $0x10] sm:$0xff]
        %v168 = vld [vmem:[%s154 + $0x18] sm:$0xff]
        %v169 = vld [vmem:[%s154 + $0x20] sm:$0xff]
        %v170 = vld [vmem:[%s154 + $0x28] sm:$0xff]
        %v171 = vld [vmem:[%s154 + $0x30] sm:$0xff]
        %v172 = vld [vmem:[%s154 + $0x38] sm:$0xff]
        %v173 = vld [vmem:[%s154 + $0x40] sm:$0xff]
        %v174 = vld [vmem:[%s154 + $0x48] sm:$0xff]
        %v175 = vld [vmem:[%s154 + $0x50] sm:$0xff]
        %v176 = vld [vmem:[%s154 + $0x58] sm:$0xff]
        %v177 = vld [vmem:[%s154 + $0x60] sm:$0xff]
        %v178 = vld [vmem:[%s154 + $0x68] sm:$0xff]
        %v179 = vld [vmem:[%s154 + $0x70] sm:$0xff]
        %v180 = vld [vmem:[%s154 + $0x78] sm:$0xff]
        %v181 = vld [vmem:[%s154 + $0x80] sm:$0xff]
        %v182 = vld [vmem:[%s154 + $0x88] sm:$0xff]
        %v183 = vld [vmem:[%s154 + $0x90] sm:$0xff]
        %v184 = vld [vmem:[%s154 + $0x98] sm:$0xff]
        %v185 = vld [vmem:[%s154 + $0xa0] sm:$0xff]
        %v186 = vld [vmem:[%s154 + $0xa8] sm:$0xff]
        %v187 = vld [vmem:[%s154 + $0xb0] sm:$0xff]
        %v188 = vld [vmem:[%s154 + $0xb8] sm:$0xff]
        %v189 = vmul.f32 %v165, %v165
        %v190 = vmul.f32 %v166, %v166
        %v191 = vmul.f32 %v167, %v167
        %v192 = vmul.f32 %v168, %v168
        %v193 = vmul.f32 %v169, %v169
        %v194 = vmul.f32 %v170, %v170
        %v195 = vmul.f32 %v171, %v171
        %v196 = vmul.f32 %v172, %v172
        %v197 = vmul.f32 %v173, %v173
        %v198 = vmul.f32 %v174, %v174
        %v199 = vmul.f32 %v175, %v175
        %v200 = vmul.f32 %v176, %v176
        %v201 = vmul.f32 %v177, %v177
        %v202 = vmul.f32 %v178, %v178
        %v203 = vmul.f32 %v179, %v179
        %v204 = vmul.f32 %v180, %v180
        %v205 = vmul.f32 %v181, %v181
        %v206 = vmul.f32 %v182, %v182
        %v207 = vmul.f32 %v183, %v183
        %v208 = vmul.f32 %v184, %v184
        %v209 = vmul.f32 %v185, %v185
        %v210 = vmul.f32 %v186, %v186
        %v211 = vmul.f32 %v187, %v187
        %v212 = vmul.f32 %v188, %v188
        %vm213 = vcmask 523264
        %v214 = vsel %vm213, %v189, 0.0
        %215 = vadd.xlane.f32.xlu0 %v214
        %v216 = vpop.xlane.xlu0 %215
        %v217 = vsel %vm213, %v190, 0.0
        %218 = vadd.xlane.f32.xlu0 %v217
        %v219 = vpop.xlane.xlu0 %218
        %v220 = vsel %vm213, %v191, 0.0
        %221 = vadd.xlane.f32.xlu0 %v220
        %v222 = vpop.xlane.xlu0 %221
        %v223 = vsel %vm213, %v192, 0.0
        %224 = vadd.xlane.f32.xlu0 %v223
        %v225 = vpop.xlane.xlu0 %224
        %v226 = vsel %vm213, %v193, 0.0
        %227 = vadd.xlane.f32.xlu0 %v226
        %v228 = vpop.xlane.xlu0 %227
        %v229 = vsel %vm213, %v194, 0.0
        %230 = vadd.xlane.f32.xlu0 %v229
        %v231 = vpop.xlane.xlu0 %230
        %v232 = vsel %vm213, %v195, 0.0
        %233 = vadd.xlane.f32.xlu0 %v232
        %v234 = vpop.xlane.xlu0 %233
        %v235 = vsel %vm213, %v196, 0.0
        %236 = vadd.xlane.f32.xlu0 %v235
        %v237 = vpop.xlane.xlu0 %236
        %v238 = vsel %vm213, %v197, 0.0
        %239 = vadd.xlane.f32.xlu0 %v238
        %v240 = vpop.xlane.xlu0 %239
        %v241 = vsel %vm213, %v198, 0.0
        %242 = vadd.xlane.f32.xlu0 %v241
        %v243 = vpop.xlane.xlu0 %242
        %v244 = vsel %vm213, %v199, 0.0
        %245 = vadd.xlane.f32.xlu0 %v244
        %v246 = vpop.xlane.xlu0 %245
        %v247 = vsel %vm213, %v200, 0.0
        %248 = vadd.xlane.f32.xlu0 %v247
        %v249 = vpop.xlane.xlu0 %248
        %v250 = vsel %vm213, %v201, 0.0
        %251 = vadd.xlane.f32.xlu0 %v250
        %v252 = vpop.xlane.xlu0 %251
        %v253 = vsel %vm213, %v202, 0.0
        %254 = vadd.xlane.f32.xlu0 %v253
        %v255 = vpop.xlane.xlu0 %254
        %v256 = vsel %vm213, %v203, 0.0
        %257 = vadd.xlane.f32.xlu0 %v256
        %v258 = vpop.xlane.xlu0 %257
        %v259 = vsel %vm213, %v204, 0.0
        %260 = vadd.xlane.f32.xlu0 %v259
        %v261 = vpop.xlane.xlu0 %260
        %v262 = vsel %vm213, %v205, 0.0
        %263 = vadd.xlane.f32.xlu0 %v262
        %v264 = vpop.xlane.xlu0 %263
        %v265 = vsel %vm213, %v206, 0.0
        %266 = vadd.xlane.f32.xlu0 %v265
        %v267 = vpop.xlane.xlu0 %266
        %v268 = vsel %vm213, %v207, 0.0
        %269 = vadd.xlane.f32.xlu0 %v268
        %v270 = vpop.xlane.xlu0 %269
        %v271 = vsel %vm213, %v208, 0.0
        %272 = vadd.xlane.f32.xlu0 %v271
        %v273 = vpop.xlane.xlu0 %272
        %v274 = vsel %vm213, %v209, 0.0
        %275 = vadd.xlane.f32.xlu0 %v274
        %v276 = vpop.xlane.xlu0 %275
        %v277 = vsel %vm213, %v210, 0.0
        %278 = vadd.xlane.f32.xlu0 %v277
        %v279 = vpop.xlane.xlu0 %278
        %v280 = vsel %vm213, %v211, 0.0
        %281 = vadd.xlane.f32.xlu0 %v280
        %v282 = vpop.xlane.xlu0 %281
        %v283 = vsel %vm213, %v212, 0.0
        %284 = vadd.xlane.f32.xlu0 %v283
        %v285 = vpop.xlane.xlu0 %284
        %v286 = vmax.f32 %v216, 1e-24
        %v287 = vmax.f32 %v219, 1e-24
        %v288 = vmax.f32 %v222, 1e-24
        %v289 = vmax.f32 %v225, 1e-24
        %v290 = vmax.f32 %v228, 1e-24
        %v291 = vmax.f32 %v231, 1e-24
        %v292 = vmax.f32 %v234, 1e-24
        %v293 = vmax.f32 %v237, 1e-24
        %v294 = vmax.f32 %v240, 1e-24
        %v295 = vmax.f32 %v243, 1e-24
        %v296 = vmax.f32 %v246, 1e-24
        %v297 = vmax.f32 %v249, 1e-24
        %v298 = vmax.f32 %v252, 1e-24
        %v299 = vmax.f32 %v255, 1e-24
        %v300 = vmax.f32 %v258, 1e-24
        %v301 = vmax.f32 %v261, 1e-24
        %v302 = vmax.f32 %v264, 1e-24
        %v303 = vmax.f32 %v267, 1e-24
        %v304 = vmax.f32 %v270, 1e-24
        %v305 = vmax.f32 %v273, 1e-24
        %v306 = vmax.f32 %v276, 1e-24
        %v307 = vmax.f32 %v279, 1e-24
        %v308 = vmax.f32 %v282, 1e-24
        %v309 = vmax.f32 %v285, 1e-24
        %v310 = vrsqrt.pop %v286
        %v311 = vmul.f32 %v310, %v286
        %v312 = vmul.f32 %v311, %v310
        %v313 = vmul.f32 0.5, %v312
        %v314 = vsub.f32 1.5, %v313
        %v315 = vmul.f32 %v310, %v314
        %vm316 = vweird.f32 %v286
        %vm317 = vweird.f32 %v310
        %vm318 = vmor %vm316, %vm317
        %v319 = vsel %vm318, %v310, %v315
        %v320 = vrsqrt.pop %v287
        %v321 = vmul.f32 %v320, %v287
        %v322 = vmul.f32 %v321, %v320
        %v323 = vmul.f32 0.5, %v322
        %v324 = vsub.f32 1.5, %v323
        %v325 = vmul.f32 %v320, %v324
        %vm326 = vweird.f32 %v287
        %vm327 = vweird.f32 %v320
        %vm328 = vmor %vm326, %vm327
        %v329 = vsel %vm328, %v320, %v325
        %v330 = vrsqrt.pop %v288
        %v331 = vmul.f32 %v330, %v288
        %v332 = vmul.f32 %v331, %v330
        %v333 = vmul.f32 0.5, %v332
        %v334 = vsub.f32 1.5, %v333
        %v335 = vmul.f32 %v330, %v334
        %vm336 = vweird.f32 %v288
        %vm337 = vweird.f32 %v330
        %vm338 = vmor %vm336, %vm337
        %v339 = vsel %vm338, %v330, %v335
        %v340 = vrsqrt.pop %v289
        %v341 = vmul.f32 %v340, %v289
        %v342 = vmul.f32 %v341, %v340
        %v343 = vmul.f32 0.5, %v342
        %v344 = vsub.f32 1.5, %v343
        %v345 = vmul.f32 %v340, %v344
        %vm346 = vweird.f32 %v289
        %vm347 = vweird.f32 %v340
        %vm348 = vmor %vm346, %vm347
        %v349 = vsel %vm348, %v340, %v345
        %v350 = vrsqrt.pop %v290
        %v351 = vmul.f32 %v350, %v290
        %v352 = vmul.f32 %v351, %v350
        %v353 = vmul.f32 0.5, %v352
        %v354 = vsub.f32 1.5, %v353
        %v355 = vmul.f32 %v350, %v354
        %vm356 = vweird.f32 %v290
        %vm357 = vweird.f32 %v350
        %vm358 = vmor %vm356, %vm357
        %v359 = vsel %vm358, %v350, %v355
        %v360 = vrsqrt.pop %v291
        %v361 = vmul.f32 %v360, %v291
        %v362 = vmul.f32 %v361, %v360
        %v363 = vmul.f32 0.5, %v362
        %v364 = vsub.f32 1.5, %v363
        %v365 = vmul.f32 %v360, %v364
        %vm366 = vweird.f32 %v291
        %vm367 = vweird.f32 %v360
        %vm368 = vmor %vm366, %vm367
        %v369 = vsel %vm368, %v360, %v365
        %v370 = vrsqrt.pop %v292
        %v371 = vmul.f32 %v370, %v292
        %v372 = vmul.f32 %v371, %v370
        %v373 = vmul.f32 0.5, %v372
        %v374 = vsub.f32 1.5, %v373
        %v375 = vmul.f32 %v370, %v374
        %vm376 = vweird.f32 %v292
        %vm377 = vweird.f32 %v370
        %vm378 = vmor %vm376, %vm377
        %v379 = vsel %vm378, %v370, %v375
        %v380 = vrsqrt.pop %v293
        %v381 = vmul.f32 %v380, %v293
        %v382 = vmul.f32 %v381, %v380
        %v383 = vmul.f32 0.5, %v382
        %v384 = vsub.f32 1.5, %v383
        %v385 = vmul.f32 %v380, %v384
        %vm386 = vweird.f32 %v293
        %vm387 = vweird.f32 %v380
        %vm388 = vmor %vm386, %vm387
        %v389 = vsel %vm388, %v380, %v385
        %v390 = vrsqrt.pop %v294
        %v391 = vmul.f32 %v390, %v294
        %v392 = vmul.f32 %v391, %v390
        %v393 = vmul.f32 0.5, %v392
        %v394 = vsub.f32 1.5, %v393
        %v395 = vmul.f32 %v390, %v394
        %vm396 = vweird.f32 %v294
        %vm397 = vweird.f32 %v390
        %vm398 = vmor %vm396, %vm397
        %v399 = vsel %vm398, %v390, %v395
        %v400 = vrsqrt.pop %v295
        %v401 = vmul.f32 %v400, %v295
        %v402 = vmul.f32 %v401, %v400
        %v403 = vmul.f32 0.5, %v402
        %v404 = vsub.f32 1.5, %v403
        %v405 = vmul.f32 %v400, %v404
        %vm406 = vweird.f32 %v295
        %vm407 = vweird.f32 %v400
        %vm408 = vmor %vm406, %vm407
        %v409 = vsel %vm408, %v400, %v405
        %v410 = vrsqrt.pop %v296
        %v411 = vmul.f32 %v410, %v296
        %v412 = vmul.f32 %v411, %v410
        %v413 = vmul.f32 0.5, %v412
        %v414 = vsub.f32 1.5, %v413
        %v415 = vmul.f32 %v410, %v414
        %vm416 = vweird.f32 %v296
        %vm417 = vweird.f32 %v410
        %vm418 = vmor %vm416, %vm417
        %v419 = vsel %vm418, %v410, %v415
        %v420 = vrsqrt.pop %v297
        %v421 = vmul.f32 %v420, %v297
        %v422 = vmul.f32 %v421, %v420
        %v423 = vmul.f32 0.5, %v422
        %v424 = vsub.f32 1.5, %v423
        %v425 = vmul.f32 %v420, %v424
        %vm426 = vweird.f32 %v297
        %vm427 = vweird.f32 %v420
        %vm428 = vmor %vm426, %vm427
        %v429 = vsel %vm428, %v420, %v425
        %v430 = vrsqrt.pop %v298
        %v431 = vmul.f32 %v430, %v298
        %v432 = vmul.f32 %v431, %v430
        %v433 = vmul.f32 0.5, %v432
        %v434 = vsub.f32 1.5, %v433
        %v435 = vmul.f32 %v430, %v434
        %vm436 = vweird.f32 %v298
        %vm437 = vweird.f32 %v430
        %vm438 = vmor %vm436, %vm437
        %v439 = vsel %vm438, %v430, %v435
        %v440 = vrsqrt.pop %v299
        %v441 = vmul.f32 %v440, %v299
        %v442 = vmul.f32 %v441, %v440
        %v443 = vmul.f32 0.5, %v442
        %v444 = vsub.f32 1.5, %v443
        %v445 = vmul.f32 %v440, %v444
        %vm446 = vweird.f32 %v299
        %vm447 = vweird.f32 %v440
        %vm448 = vmor %vm446, %vm447
        %v449 = vsel %vm448, %v440, %v445
        %v450 = vrsqrt.pop %v300
        %v451 = vmul.f32 %v450, %v300
        %v452 = vmul.f32 %v451, %v450
        %v453 = vmul.f32 0.5, %v452
        %v454 = vsub.f32 1.5, %v453
        %v455 = vmul.f32 %v450, %v454
        %vm456 = vweird.f32 %v300
        %vm457 = vweird.f32 %v450
        %vm458 = vmor %vm456, %vm457
        %v459 = vsel %vm458, %v450, %v455
        %v460 = vrsqrt.pop %v301
        %v461 = vmul.f32 %v460, %v301
        %v462 = vmul.f32 %v461, %v460
        %v463 = vmul.f32 0.5, %v462
        %v464 = vsub.f32 1.5, %v463
        %v465 = vmul.f32 %v460, %v464
        %vm466 = vweird.f32 %v301
        %vm467 = vweird.f32 %v460
        %vm468 = vmor %vm466, %vm467
        %v469 = vsel %vm468, %v460, %v465
        %v470 = vrsqrt.pop %v302
        %v471 = vmul.f32 %v470, %v302
        %v472 = vmul.f32 %v471, %v470
        %v473 = vmul.f32 0.5, %v472
        %v474 = vsub.f32 1.5, %v473
        %v475 = vmul.f32 %v470, %v474
        %vm476 = vweird.f32 %v302
        %vm477 = vweird.f32 %v470
        %vm478 = vmor %vm476, %vm477
        %v479 = vsel %vm478, %v470, %v475
        %v480 = vrsqrt.pop %v303
        %v481 = vmul.f32 %v480, %v303
        %v482 = vmul.f32 %v481, %v480
        %v483 = vmul.f32 0.5, %v482
        %v484 = vsub.f32 1.5, %v483
        %v485 = vmul.f32 %v480, %v484
        %vm486 = vweird.f32 %v303
        %vm487 = vweird.f32 %v480
        %vm488 = vmor %vm486, %vm487
        %v489 = vsel %vm488, %v480, %v485
        %v490 = vrsqrt.pop %v304
        %v491 = vmul.f32 %v490, %v304
        %v492 = vmul.f32 %v491, %v490
        %v493 = vmul.f32 0.5, %v492
        %v494 = vsub.f32 1.5, %v493
        %v495 = vmul.f32 %v490, %v494
        %vm496 = vweird.f32 %v304
        %vm497 = vweird.f32 %v490
        %vm498 = vmor %vm496, %vm497
        %v499 = vsel %vm498, %v490, %v495
        %v500 = vrsqrt.pop %v305
        %v501 = vmul.f32 %v500, %v305
        %v502 = vmul.f32 %v501, %v500
        %v503 = vmul.f32 0.5, %v502
        %v504 = vsub.f32 1.5, %v503
        %v505 = vmul.f32 %v500, %v504
        %vm506 = vweird.f32 %v305
        %vm507 = vweird.f32 %v500
        %vm508 = vmor %vm506, %vm507
        %v509 = vsel %vm508, %v500, %v505
        %v510 = vrsqrt.pop %v306
        %v511 = vmul.f32 %v510, %v306
        %v512 = vmul.f32 %v511, %v510
        %v513 = vmul.f32 0.5, %v512
        %v514 = vsub.f32 1.5, %v513
        %v515 = vmul.f32 %v510, %v514
        %vm516 = vweird.f32 %v306
        %vm517 = vweird.f32 %v510
        %vm518 = vmor %vm516, %vm517
        %v519 = vsel %vm518, %v510, %v515
        %v520 = vrsqrt.pop %v307
        %v521 = vmul.f32 %v520, %v307
        %v522 = vmul.f32 %v521, %v520
        %v523 = vmul.f32 0.5, %v522
        %v524 = vsub.f32 1.5, %v523
        %v525 = vmul.f32 %v520, %v524
        %vm526 = vweird.f32 %v307
        %vm527 = vweird.f32 %v520
        %vm528 = vmor %vm526, %vm527
        %v529 = vsel %vm528, %v520, %v525
        %v530 = vrsqrt.pop %v308
        %v531 = vmul.f32 %v530, %v308
        %v532 = vmul.f32 %v531, %v530
        %v533 = vmul.f32 0.5, %v532
        %v534 = vsub.f32 1.5, %v533
        %v535 = vmul.f32 %v530, %v534
        %vm536 = vweird.f32 %v308
        %vm537 = vweird.f32 %v530
        %vm538 = vmor %vm536, %vm537
        %v539 = vsel %vm538, %v530, %v535
        %v540 = vrsqrt.pop %v309
        %v541 = vmul.f32 %v540, %v309
        %v542 = vmul.f32 %v541, %v540
        %v543 = vmul.f32 0.5, %v542
        %v544 = vsub.f32 1.5, %v543
        %v545 = vmul.f32 %v540, %v544
        %vm546 = vweird.f32 %v309
        %vm547 = vweird.f32 %v540
        %vm548 = vmor %vm546, %vm547
        %v549 = vsel %vm548, %v540, %v545
        %v550 = vmul.f32 %v319, 8.0
        %v551 = vmul.f32 %v329, 8.0
        %v552 = vmul.f32 %v339, 8.0
        %v553 = vmul.f32 %v349, 8.0
        %v554 = vmul.f32 %v359, 8.0
        %v555 = vmul.f32 %v369, 8.0
        %v556 = vmul.f32 %v379, 8.0
        %v557 = vmul.f32 %v389, 8.0
        %v558 = vmul.f32 %v399, 8.0
        %v559 = vmul.f32 %v409, 8.0
        %v560 = vmul.f32 %v419, 8.0
        %v561 = vmul.f32 %v429, 8.0
        %v562 = vmul.f32 %v439, 8.0
        %v563 = vmul.f32 %v449, 8.0
        %v564 = vmul.f32 %v459, 8.0
        %v565 = vmul.f32 %v469, 8.0
        %v566 = vmul.f32 %v479, 8.0
        %v567 = vmul.f32 %v489, 8.0
        %v568 = vmul.f32 %v499, 8.0
        %v569 = vmul.f32 %v509, 8.0
        %v570 = vmul.f32 %v519, 8.0
        %v571 = vmul.f32 %v529, 8.0
        %v572 = vmul.f32 %v539, 8.0
        %v573 = vmul.f32 %v549, 8.0
        %v574 = vmul.f32 %v165, %v550
        %v575 = vmul.f32 %v166, %v551
        %v576 = vmul.f32 %v167, %v552
        %v577 = vmul.f32 %v168, %v553
        %v578 = vmul.f32 %v169, %v554
        %v579 = vmul.f32 %v170, %v555
        %v580 = vmul.f32 %v171, %v556
        %v581 = vmul.f32 %v172, %v557
        %v582 = vmul.f32 %v173, %v558
        %v583 = vmul.f32 %v174, %v559
        %v584 = vmul.f32 %v175, %v560
        %v585 = vmul.f32 %v176, %v561
        %v586 = vmul.f32 %v177, %v562
        %v587 = vmul.f32 %v178, %v563
        %v588 = vmul.f32 %v179, %v564
        %v589 = vmul.f32 %v180, %v565
        %v590 = vmul.f32 %v181, %v566
        %v591 = vmul.f32 %v182, %v567
        %v592 = vmul.f32 %v183, %v568
        %v593 = vmul.f32 %v184, %v569
        %v594 = vmul.f32 %v185, %v570
        %v595 = vmul.f32 %v186, %v571
        %v596 = vmul.f32 %v187, %v572
        %v597 = vmul.f32 %v188, %v573
        %v598 = vld [vmem:[%s1] sm:$0x1]
        %v600 = vperm.slane %v598, 0
        %v602 = vmul.f32 %v574, %v600
        %v603 = vmul.f32 %v575, %v600
        %v604 = vmul.f32 %v576, %v600
        %v605 = vmul.f32 %v577, %v600
        %v606 = vmul.f32 %v578, %v600
        %v607 = vmul.f32 %v579, %v600
        %v608 = vmul.f32 %v580, %v600
        %v609 = vmul.f32 %v581, %v600
        %v610 = vmul.f32 %v582, %v600
        %v611 = vmul.f32 %v583, %v600
        %v612 = vmul.f32 %v584, %v600
        %v613 = vmul.f32 %v585, %v600
        %v614 = vmul.f32 %v586, %v600
        %v615 = vmul.f32 %v587, %v600
        %v616 = vmul.f32 %v588, %v600
        %v617 = vmul.f32 %v589, %v600
        %v618 = vmul.f32 %v590, %v600
        %v619 = vmul.f32 %v591, %v600
        %v620 = vmul.f32 %v592, %v600
        %v621 = vmul.f32 %v593, %v600
        %v622 = vmul.f32 %v594, %v600
        %v623 = vmul.f32 %v595, %v600
        %v624 = vmul.f32 %v596, %v600
        %v625 = vmul.f32 %v597, %v600
        %626 = vst.msk [vmem:[%s145] sm:$0xff] %vm213, %v602
        %627 = vst.msk [vmem:[%s145 + $0x8] sm:$0xff] %vm213, %v603
        %628 = vst.msk [vmem:[%s145 + $0x10] sm:$0xff] %vm213, %v604
        %629 = vst.msk [vmem:[%s145 + $0x18] sm:$0xff] %vm213, %v605
        %630 = vst.msk [vmem:[%s145 + $0x20] sm:$0xff] %vm213, %v606
        %631 = vst.msk [vmem:[%s145 + $0x28] sm:$0xff] %vm213, %v607
        %632 = vst.msk [vmem:[%s145 + $0x30] sm:$0xff] %vm213, %v608
        %633 = vst.msk [vmem:[%s145 + $0x38] sm:$0xff] %vm213, %v609
        %634 = vst.msk [vmem:[%s145 + $0x40] sm:$0xff] %vm213, %v610
        %635 = vst.msk [vmem:[%s145 + $0x48] sm:$0xff] %vm213, %v611
        %636 = vst.msk [vmem:[%s145 + $0x50] sm:$0xff] %vm213, %v612
        %637 = vst.msk [vmem:[%s145 + $0x58] sm:$0xff] %vm213, %v613
        %638 = vst.msk [vmem:[%s145 + $0x60] sm:$0xff] %vm213, %v614
        %639 = vst.msk [vmem:[%s145 + $0x68] sm:$0xff] %vm213, %v615
        %640 = vst.msk [vmem:[%s145 + $0x70] sm:$0xff] %vm213, %v616
        %641 = vst.msk [vmem:[%s145 + $0x78] sm:$0xff] %vm213, %v617
        %642 = vst.msk [vmem:[%s145 + $0x80] sm:$0xff] %vm213, %v618
        %643 = vst.msk [vmem:[%s145 + $0x88] sm:$0xff] %vm213, %v619
        %644 = vst.msk [vmem:[%s145 + $0x90] sm:$0xff] %vm213, %v620
        %645 = vst.msk [vmem:[%s145 + $0x98] sm:$0xff] %vm213, %v621
        %646 = vst.msk [vmem:[%s145 + $0xa0] sm:$0xff] %vm213, %v622
        %647 = vst.msk [vmem:[%s145 + $0xa8] sm:$0xff] %vm213, %v623
        %648 = vst.msk [vmem:[%s145 + $0xb0] sm:$0xff] %vm213, %v624
        %649 = vst.msk [vmem:[%s145 + $0xb8] sm:$0xff] %vm213, %v625
        %s650 = sand.u32 %s68, 1
        %s651 = sand.u32 %s68, 1
        %s652 = smul.addr %s651, 192
        %s653 = scalar_lea.vmem [#allocation2], %s652
        // Predicated region
        $region29: #{tpu_custom_call.1} parent=27 // pred_check
          %p654 = pneg %p78
        $region30: #{tpu_custom_call.1} parent=27 // pred_check_branch
          %656 = sbr.rel (%p654) target = $region32
        $region31: #{tpu_custom_call.1} parent=27 // pred_region
          %s657 = smul.u32 24, %s13
          %s658 = ssub.s32 25, %s657
          %p659 = scmp.lt.s32.totalorder %s658, 24
          %s660 = scalar_select %p659, %s658, 24
          %s661 = smul.u32 8, %s660
          %p662 = scmp.ne.s32.totalorder 0, %s661
          %s663 = smul.addr %s657, 8
          %s664 = scalar_lea.vmem %s2, %s663
          // Predicated region
          $region33: #{tpu_custom_call.1} parent=31 // pred_check
            %p665 = pneg %p662
          $region34: #{tpu_custom_call.1} parent=31 // pred_check_branch
            %667 = sbr.rel (%p665) target = $region36
          $region35: #{tpu_custom_call.1} parent=31 // pred_region
            // Predicated region
            $region37: #{tpu_custom_call.1} parent=35 // pred_check
              _
            $region38: #{tpu_custom_call.1} parent=35 // pred_check_branch
              %669 = sbr.rel (0) target = $region40
            $region39: #{tpu_custom_call.1} parent=35 // pred_region
              // Predicated region
              $region59: #{tpu_custom_call.1} parent=39 // pred_check
                _
              $region60: #{tpu_custom_call.1} parent=39 // pred_check_branch
                %766 = sbr.rel (0) target = $region62
              $region61: #{tpu_custom_call.1} parent=39 // pred_region
                %s767 = sdiv.u32.pop %s660, 24
                %s768 = srem.u32.pop %s660, 24
                // While loop
                $region63: #{tpu_custom_call.1} parent=61 // loop_pre_header
                  _
                $region64: #{tpu_custom_call.1} parent=61 // loop_header
                  %s770 = sphi 0, %s772
                  %p771 = scmp.ge.s32.totalorder %s770, %s767
                  %s775 = sphi 0, %s828
                  %s776 = sphi %s653, %s831
                  %s777 = sphi %s664, %s832
                $region65: #{tpu_custom_call.1} parent=61 // loop_header_branch
                  %774 = sbr.rel (%p771) target = $region69
                $region66: #{tpu_custom_call.1} parent=61 // loop_body
                  %v778 = vld [vmem:[%s776] sm:$0xff]
                  %779 = vst [vmem:[%s777] sm:$0xff] %v778
                  %v780 = vld [vmem:[%s776 + $0x8] sm:$0xff]
                  %781 = vst [vmem:[%s777 + $0x8] sm:$0xff] %v780
                  %v782 = vld [vmem:[%s776 + $0x10] sm:$0xff]
                  %783 = vst [vmem:[%s777 + $0x10] sm:$0xff] %v782
                  %v784 = vld [vmem:[%s776 + $0x18] sm:$0xff]
                  %785 = vst [vmem:[%s777 + $0x18] sm:$0xff] %v784
                  %v786 = vld [vmem:[%s776 + $0x20] sm:$0xff]
                  %787 = vst [vmem:[%s777 + $0x20] sm:$0xff] %v786
                  %v788 = vld [vmem:[%s776 + $0x28] sm:$0xff]
                  %789 = vst [vmem:[%s777 + $0x28] sm:$0xff] %v788
                  %v790 = vld [vmem:[%s776 + $0x30] sm:$0xff]
                  %791 = vst [vmem:[%s777 + $0x30] sm:$0xff] %v790
                  %v792 = vld [vmem:[%s776 + $0x38] sm:$0xff]
                  %793 = vst [vmem:[%s777 + $0x38] sm:$0xff] %v792
                  %v794 = vld [vmem:[%s776 + $0x40] sm:$0xff]
                  %795 = vst [vmem:[%s777 + $0x40] sm:$0xff] %v794
                  %v796 = vld [vmem:[%s776 + $0x48] sm:$0xff]
                  %797 = vst [vmem:[%s777 + $0x48] sm:$0xff] %v796
                  %v798 = vld [vmem:[%s776 + $0x50] sm:$0xff]
                  %799 = vst [vmem:[%s777 + $0x50] sm:$0xff] %v798
                  %v800 = vld [vmem:[%s776 + $0x58] sm:$0xff]
                  %801 = vst [vmem:[%s777 + $0x58] sm:$0xff] %v800
                  %v802 = vld [vmem:[%s776 + $0x60] sm:$0xff]
                  %803 = vst [vmem:[%s777 + $0x60] sm:$0xff] %v802
                  %v804 = vld [vmem:[%s776 + $0x68] sm:$0xff]
                  %805 = vst [vmem:[%s777 + $0x68] sm:$0xff] %v804
                  %v806 = vld [vmem:[%s776 + $0x70] sm:$0xff]
                  %807 = vst [vmem:[%s777 + $0x70] sm:$0xff] %v806
                  %v808 = vld [vmem:[%s776 + $0x78] sm:$0xff]
                  %809 = vst [vmem:[%s777 + $0x78] sm:$0xff] %v808
                  %v810 = vld [vmem:[%s776 + $0x80] sm:$0xff]
                  %811 = vst [vmem:[%s777 + $0x80] sm:$0xff] %v810
                  %v812 = vld [vmem:[%s776 + $0x88] sm:$0xff]
                  %813 = vst [vmem:[%s777 + $0x88] sm:$0xff] %v812
                  %v814 = vld [vmem:[%s776 + $0x90] sm:$0xff]
                  %815 = vst [vmem:[%s777 + $0x90] sm:$0xff] %v814
                  %v816 = vld [vmem:[%s776 + $0x98] sm:$0xff]
                  %817 = vst [vmem:[%s777 + $0x98] sm:$0xff] %v816
                  %v818 = vld [vmem:[%s776 + $0xa0] sm:$0xff]
                  %819 = vst [vmem:[%s777 + $0xa0] sm:$0xff] %v818
                  %v820 = vld [vmem:[%s776 + $0xa8] sm:$0xff]
                  %821 = vst [vmem:[%s777 + $0xa8] sm:$0xff] %v820
                  %v822 = vld [vmem:[%s776 + $0xb0] sm:$0xff]
                  %823 = vst [vmem:[%s777 + $0xb0] sm:$0xff] %v822
                  %v824 = vld [vmem:[%s776 + $0xb8] sm:$0xff]
                  %825 = vst [vmem:[%s777 + $0xb8] sm:$0xff] %v824
                  %s826 = sadd.s32 1, %s775
                  %p827 = scmp.ge.s32.totalorder %s826, %s767
                  %s828 = scalar_select %p827, 0, %s826
                  %s829 = smul.u32 %s828, 192
                  %s830 = smul.u32 %s828, 192
                  %s831 = scalar_lea.vmem %s653, %s829 [#allocation2]
                  %s832 = scalar_lea.vmem %s664, %s830
                $region67: #{tpu_custom_call.1} parent=61 // loop_footer
                  %s772 = sadd.s32 %s770, 1
                $region68: #{tpu_custom_call.1} parent=61 // loop_footer_branch
                  %769 = sbr.rel target = $region64
                $region69: #{tpu_custom_call.1} parent=61 // loop_exit
                  _
                %s833 = sdiv.u32.pop %s660, 24
                %s834 = srem.u32.pop %s660, 24
                %s835 = smul.u32 %s833, 24
                %s836 = smul.u32 8, %s835
                %s837 = scalar_lea.vmem %s653, %s836 [#allocation2]
                %s838 = smul.u32 8, %s835
                %s839 = scalar_lea.vmem %s664, %s838
                // While loop
                $region70: #{tpu_custom_call.1} parent=61 // loop_pre_header
                  _
                $region71: #{tpu_custom_call.1} parent=61 // loop_header
                  %s841 = sphi 0, %s843
                  %p842 = scmp.ge.s32.totalorder %s841, %s834
                  %s846 = sphi 0, %s853
                  %s847 = sphi %s837, %s856
                  %s848 = sphi %s839, %s857
                $region72: #{tpu_custom_call.1} parent=61 // loop_header_branch
                  %845 = sbr.rel (%p842) target = $region76
                $region73: #{tpu_custom_call.1} parent=61 // loop_body
                  %v849 = vld [vmem:[%s847] sm:$0xff]
                  %850 = vst [vmem:[%s848] sm:$0xff] %v849
                  %s851 = sadd.s32 1, %s846
                  %p852 = scmp.ge.s32.totalorder %s851, %s834
                  %s853 = scalar_select %p852, 0, %s851
                  %s854 = smul.u32 %s853, 8
                  %s855 = smul.u32 %s853, 8
                  %s856 = scalar_lea.vmem %s837, %s854 [#allocation2]
                  %s857 = scalar_lea.vmem %s839, %s855
                $region74: #{tpu_custom_call.1} parent=61 // loop_footer
                  %s843 = sadd.s32 %s841, 1
                $region75: #{tpu_custom_call.1} parent=61 // loop_footer_branch
                  %840 = sbr.rel target = $region71
                $region76: #{tpu_custom_call.1} parent=61 // loop_exit
                  _
              $region62: #{tpu_custom_call.1} parent=39 // pred_fallthru
                _
              // Predicated region
              $region77: #{tpu_custom_call.1} parent=39 // pred_check
                _
              $region78: #{tpu_custom_call.1} parent=39 // pred_check_branch
                %859 = sbr.rel target = $region80
              $region79: #{tpu_custom_call.1} parent=39 // pred_region
                _
              $region80: #{tpu_custom_call.1} parent=39 // pred_fallthru
                _
            $region40: #{tpu_custom_call.1} parent=35 // pred_fallthru
              _
            // Predicated region
            $region41: #{tpu_custom_call.1} parent=35 // pred_check
              _
            $region42: #{tpu_custom_call.1} parent=35 // pred_check_branch
              %671 = sbr.rel target = $region44
            $region43: #{tpu_custom_call.1} parent=35 // pred_region
              %s673 = ssub.s32 256, 1
              %s674 = sdiv.u32.pop %s660, 24
              %s675 = srem.u32.pop %s660, 24
              // While loop
              $region45: #{tpu_custom_call.1} parent=43 // loop_pre_header
                _
              $region46: #{tpu_custom_call.1} parent=43 // loop_header
                %s677 = sphi 0, %s679
                %p678 = scmp.ge.s32.totalorder %s677, %s674
                %s682 = sphi 0, %s735
                %s683 = sphi %s653, %s738
                %s684 = sphi %s664, %s739
              $region47: #{tpu_custom_call.1} parent=43 // loop_header_branch
                %681 = sbr.rel (%p678) target = $region51
              $region48: #{tpu_custom_call.1} parent=43 // loop_body
                %v685 = vld [vmem:[%s683] sm:%s673]
                %686 = vst [vmem:[%s684] sm:%s673] %v685
                %v687 = vld [vmem:[%s683 + $0x8] sm:%s673]
                %688 = vst [vmem:[%s684 + $0x8] sm:%s673] %v687
                %v689 = vld [vmem:[%s683 + $0x10] sm:%s673]
                %690 = vst [vmem:[%s684 + $0x10] sm:%s673] %v689
                %v691 = vld [vmem:[%s683 + $0x18] sm:%s673]
                %692 = vst [vmem:[%s684 + $0x18] sm:%s673] %v691
                %v693 = vld [vmem:[%s683 + $0x20] sm:%s673]
                %694 = vst [vmem:[%s684 + $0x20] sm:%s673] %v693
                %v695 = vld [vmem:[%s683 + $0x28] sm:%s673]
                %696 = vst [vmem:[%s684 + $0x28] sm:%s673] %v695
                %v697 = vld [vmem:[%s683 + $0x30] sm:%s673]
                %698 = vst [vmem:[%s684 + $0x30] sm:%s673] %v697
                %v699 = vld [vmem:[%s683 + $0x38] sm:%s673]
                %700 = vst [vmem:[%s684 + $0x38] sm:%s673] %v699
                %v701 = vld [vmem:[%s683 + $0x40] sm:%s673]
                %702 = vst [vmem:[%s684 + $0x40] sm:%s673] %v701
                %v703 = vld [vmem:[%s683 + $0x48] sm:%s673]
                %704 = vst [vmem:[%s684 + $0x48] sm:%s673] %v703
                %v705 = vld [vmem:[%s683 + $0x50] sm:%s673]
                %706 = vst [vmem:[%s684 + $0x50] sm:%s673] %v705
                %v707 = vld [vmem:[%s683 + $0x58] sm:%s673]
                %708 = vst [vmem:[%s684 + $0x58] sm:%s673] %v707
                %v709 = vld [vmem:[%s683 + $0x60] sm:%s673]
                %710 = vst [vmem:[%s684 + $0x60] sm:%s673] %v709
                %v711 = vld [vmem:[%s683 + $0x68] sm:%s673]
                %712 = vst [vmem:[%s684 + $0x68] sm:%s673] %v711
                %v713 = vld [vmem:[%s683 + $0x70] sm:%s673]
                %714 = vst [vmem:[%s684 + $0x70] sm:%s673] %v713
                %v715 = vld [vmem:[%s683 + $0x78] sm:%s673]
                %716 = vst [vmem:[%s684 + $0x78] sm:%s673] %v715
                %v717 = vld [vmem:[%s683 + $0x80] sm:%s673]
                %718 = vst [vmem:[%s684 + $0x80] sm:%s673] %v717
                %v719 = vld [vmem:[%s683 + $0x88] sm:%s673]
                %720 = vst [vmem:[%s684 + $0x88] sm:%s673] %v719
                %v721 = vld [vmem:[%s683 + $0x90] sm:%s673]
                %722 = vst [vmem:[%s684 + $0x90] sm:%s673] %v721
                %v723 = vld [vmem:[%s683 + $0x98] sm:%s673]
                %724 = vst [vmem:[%s684 + $0x98] sm:%s673] %v723
                %v725 = vld [vmem:[%s683 + $0xa0] sm:%s673]
                %726 = vst [vmem:[%s684 + $0xa0] sm:%s673] %v725
                %v727 = vld [vmem:[%s683 + $0xa8] sm:%s673]
                %728 = vst [vmem:[%s684 + $0xa8] sm:%s673] %v727
                %v729 = vld [vmem:[%s683 + $0xb0] sm:%s673]
                %730 = vst [vmem:[%s684 + $0xb0] sm:%s673] %v729
                %v731 = vld [vmem:[%s683 + $0xb8] sm:%s673]
                %732 = vst [vmem:[%s684 + $0xb8] sm:%s673] %v731
                %s733 = sadd.s32 1, %s682
                %p734 = scmp.ge.s32.totalorder %s733, %s674
                %s735 = scalar_select %p734, 0, %s733
                %s736 = smul.u32 %s735, 192
                %s737 = smul.u32 %s735, 192
                %s738 = scalar_lea.vmem %s653, %s736 [#allocation2]
                %s739 = scalar_lea.vmem %s664, %s737
              $region49: #{tpu_custom_call.1} parent=43 // loop_footer
                %s679 = sadd.s32 %s677, 1
              $region50: #{tpu_custom_call.1} parent=43 // loop_footer_branch
                %676 = sbr.rel target = $region46
              $region51: #{tpu_custom_call.1} parent=43 // loop_exit
                _
              %s740 = sdiv.u32.pop %s660, 24
              %s741 = srem.u32.pop %s660, 24
              %s742 = smul.u32 %s740, 24
              %s743 = smul.u32 8, %s742
              %s744 = scalar_lea.vmem %s653, %s743 [#allocation2]
              %s745 = smul.u32 8, %s742
              %s746 = scalar_lea.vmem %s664, %s745
              // While loop
              $region52: #{tpu_custom_call.1} parent=43 // loop_pre_header
                _
              $region53: #{tpu_custom_call.1} parent=43 // loop_header
                %s748 = sphi 0, %s750
                %p749 = scmp.ge.s32.totalorder %s748, %s741
                %s753 = sphi 0, %s760
                %s754 = sphi %s744, %s763
                %s755 = sphi %s746, %s764
              $region54: #{tpu_custom_call.1} parent=43 // loop_header_branch
                %752 = sbr.rel (%p749) target = $region58
              $region55: #{tpu_custom_call.1} parent=43 // loop_body
                %v756 = vld [vmem:[%s754] sm:%s673]
                %757 = vst [vmem:[%s755] sm:%s673] %v756
                %s758 = sadd.s32 1, %s753
                %p759 = scmp.ge.s32.totalorder %s758, %s741
                %s760 = scalar_select %p759, 0, %s758
                %s761 = smul.u32 %s760, 8
                %s762 = smul.u32 %s760, 8
                %s763 = scalar_lea.vmem %s744, %s761 [#allocation2]
                %s764 = scalar_lea.vmem %s746, %s762
              $region56: #{tpu_custom_call.1} parent=43 // loop_footer
                %s750 = sadd.s32 %s748, 1
              $region57: #{tpu_custom_call.1} parent=43 // loop_footer_branch
                %747 = sbr.rel target = $region53
              $region58: #{tpu_custom_call.1} parent=43 // loop_exit
                _
            $region44: #{tpu_custom_call.1} parent=35 // pred_fallthru
              _
          $region36: #{tpu_custom_call.1} parent=31 // pred_fallthru
            _
          %860 = vnop
        $region32: #{tpu_custom_call.1} parent=27 // pred_fallthru
          _
      $region28: #{tpu_custom_call.1} parent=5 // pred_fallthru
        _
      %p861 = scmp.le.s32.totalorder 2, %s8
      // Predicated region
      $region81: #{tpu_custom_call.1} parent=5 // pred_check
        %p862 = pneg %p861
      $region82: #{tpu_custom_call.1} parent=5 // pred_check_branch
        %864 = sbr.rel (%p862) target = $region84
      $region83: #{tpu_custom_call.1} parent=5 // pred_region
        %s865 = ssub.s32 %s8, 2
        // Predicated region
        $region85: #{tpu_custom_call.1} parent=83 // pred_check
          %p866 = pneg %p84
        $region86: #{tpu_custom_call.1} parent=83 // pred_check_branch
          %868 = sbr.rel (%p866) target = $region88
        $region87: #{tpu_custom_call.1} parent=83 // pred_region
          %s869 = sand.u32 %s69, 1
          %s870 = sand.u32 %s69, 1
          %s871 = smul.addr %s870, 192
          %s872 = scalar_lea.vmem [#allocation2], %s871
        $region88: #{tpu_custom_call.1} parent=83 // pred_fallthru
          _
      $region84: #{tpu_custom_call.1} parent=5 // pred_fallthru
        _
    $region6: #{tpu_custom_call.1} parent=1 // loop_footer
      %s12 = sadd.s32 1, %s8
    $region7: #{tpu_custom_call.1} parent=1 // loop_footer_branch
      %7 = sbr.rel target = $region3
    $region8: #{tpu_custom_call.1} parent=1 // loop_exit
      _

</llo_original>
